<compile_context>
chip_gen: v7x
topology: tpu7x:2x2x1
jax: 0.10.0
libtpu: 0.0.40
codegen_flags: <defaults>
</compile_context>

<pallas_src>
import functools

import jax
import jax.numpy as jnp
from jax import lax
from jax.experimental import pallas as pl
from jax.experimental.pallas import tpu as pltpu


def _conv2d_kernel(x_ref, w_ref, b_ref, o_ref, *, stride, kh, kw, h_out, w_out):
    """Strided Conv2d = im2col (dense slices only) + one MXU dot + bias.

    x_ref: (N, S, S, Cin, Hp2, Wp2)  zero-padded input, deinterleaved by
           (row, col) parity so each tap is a dense contiguous slice.
    w_ref: (Cout, KH*KW*Cin)         taps flattened (i-major, j, cin-minor).
    b_ref: (Cout, 1)                 bias column (broadcasts along lanes).
    o_ref: (N, Cout, Hout*Wout)      lane-dense output slab.
    """
    n_batch = o_ref.shape[0]
    c_in = x_ref.shape[3]
    hw = h_out * w_out
    w_mat = w_ref[...]          # (Cout, K) -- loaded once, no per-tap broadcast
    bias = b_ref[...]           # (Cout, 1)
    for n in range(n_batch):    # tiny static batch loop (N == 1 here)
        cols = []
        for i in range(kh):
            for j in range(kw):
                # Dense (unit-stride) slice of the deinterleaved input.
                patch = x_ref[n, i % stride, j % stride, :,
                              pl.ds(i // stride, h_out),
                              pl.ds(j // stride, w_out)]       # (Cin, Hout, Wout)
                cols.append(patch.reshape(c_in, hw))
        im2col = jnp.concatenate(cols, axis=0)                 # (KH*KW*Cin, HW)
        out = lax.dot_general(                                 # one MXU push
            w_mat, im2col,
            dimension_numbers=(((1,), (0,)), ((), ())),
            preferred_element_type=jnp.float32)                # (Cout, HW)
        o_ref[n] = (out + bias).astype(o_ref.dtype)


def conv2d_pallas(x, w, b, *, stride=2, padding=(2, 3)):
    n, c_in, h, wd = x.shape
    c_out, _, kh, kw = w.shape
    ph, pw = padding
    h_out = (h + 2 * ph - kh) // stride + 1
    w_out = (wd + 2 * pw - kw) // stride + 1

    # Spatial extents of the padded input, rounded up to a multiple of the
    # stride and large enough for every tap's dense (deinterleaved) slice.
    hp2 = max((kh - 1) // stride + h_out, -((h + 2 * ph) // -stride))
    wp2 = max((kw - 1) // stride + w_out, -((wd + 2 * pw) // -stride))

    # TODO(synk): padding + deinterleave stay in the wrapper (layout plumbing);
    # folding them into the kernel would reintroduce strided VMEM writes.
    x_pad = jnp.pad(x, ((0, 0), (0, 0),
                        (ph, stride * hp2 - h - ph),
                        (pw, stride * wp2 - wd - pw)))
    # Deinterleave by stride parity: (N, Cin, Hp2, S, Wp2, S) -> (N, S, S, Cin, Hp2, Wp2)
    x_d = x_pad.reshape(n, c_in, hp2, stride, wp2, stride).transpose(0, 3, 5, 1, 2, 4)

    # Flatten weight taps to (Cout, KH*KW*Cin), matching the im2col row order.
    w_flat = jnp.transpose(w, (0, 2, 3, 1)).reshape(c_out, kh * kw * c_in)
    b_col = b.reshape(c_out, 1)

    kernel = functools.partial(_conv2d_kernel, stride=stride, kh=kh, kw=kw,
                               h_out=h_out, w_out=w_out)
    out_flat = pl.pallas_call(
        kernel,
        out_shape=jax.ShapeDtypeStruct((n, c_out, h_out * w_out), jnp.float32),
        # Everything is a few KB: whole arrays resident in VMEM, no grid.
        in_specs=[pl.BlockSpec(memory_space=pltpu.MemorySpace.VMEM)] * 3,
        out_specs=pl.BlockSpec(memory_space=pltpu.MemorySpace.VMEM),
    )(x_d, w_flat, b_col)
    return out_flat.reshape(n, c_out, h_out, w_out)


if __name__ == "__main__":
    key = jax.random.PRNGKey(0)
    kx, kw_, kb = jax.random.split(key, 3)

    # module's forward implies input (1, 2, 6, 6)
    x = jax.random.uniform(kx, (1, 2, 6, 6), dtype=jnp.float32)

    # deterministic Conv2d parameter init (PyTorch-style uniform(-1/sqrt(fan_in), +))
    fan_in = 2 * 3 * 3
    bound = 1.0 / (fan_in ** 0.5)
    w = jax.random.uniform(kw_, (3, 2, 3, 3), dtype=jnp.float32,
                           minval=-bound, maxval=bound)
    b = jax.random.uniform(kb, (3,), dtype=jnp.float32,
                           minval=-bound, maxval=bound)

    out = jax.block_until_ready(conv2d_pallas(x, w, b))

    # reference check with XLA conv
    ref = jax.lax.conv_general_dilated(
        x, w, window_strides=(2, 2), padding=((2, 2), (3, 3)),
        dimension_numbers=("NCHW", "OIHW", "NCHW")) + b.reshape(1, -1, 1, 1)

    assert out.shape == (1, 3, 4, 5), out.shape
    assert jnp.allclose(out, ref, atol=1e-5, rtol=1e-5)
    print("KERNEL_OK")
</pallas_src>

<mosaic_0001>
module attributes {stable_mosaic.version = 11 : i64} {
  func.func @_conv2d_kernel(%arg0: memref<1x2x2x2x5x6xf32, #tpu.memory_space<vmem>>, %arg1: memref<3x18xf32, #tpu.memory_space<vmem>>, %arg2: memref<3x1xf32, #tpu.memory_space<vmem>>, %arg3: memref<1x3x20xf32, #tpu.memory_space<vmem>>) attributes {dimension_semantics = [], scalar_prefetch = 0 : i64, scratch_operands = 0 : i64, tpu.core_type = #tpu.core_type<tc>} {
    %c0 = arith.constant 0 : index
    %c0_0 = arith.constant 0 : index
    %0 = vector.load %arg1[%c0, %c0_0] : memref<3x18xf32, #tpu.memory_space<vmem>>, vector<3x18xf32>
    %c0_1 = arith.constant 0 : index
    %c0_2 = arith.constant 0 : index
    %1 = vector.load %arg2[%c0_1, %c0_2] : memref<3x1xf32, #tpu.memory_space<vmem>>, vector<3x1xf32>
    %c0_3 = arith.constant 0 : index
    %c0_4 = arith.constant 0 : index
    %c0_5 = arith.constant 0 : index
    %c0_6 = arith.constant 0 : index
    %c0_7 = arith.constant 0 : index
    %c0_8 = arith.constant 0 : index
    %2 = vector.load %arg0[%c0_3, %c0_4, %c0_5, %c0_6, %c0_7, %c0_8] : memref<1x2x2x2x5x6xf32, #tpu.memory_space<vmem>>, vector<1x1x1x2x4x5xf32>
    %3 = vector.shape_cast %2 : vector<1x1x1x2x4x5xf32> to vector<2x4x5xf32>
    %4 = vector.shape_cast %3 : vector<2x4x5xf32> to vector<2x20xf32>
    %c0_9 = arith.constant 0 : index
    %c0_10 = arith.constant 0 : index
    %c1 = arith.constant 1 : index
    %c0_11 = arith.constant 0 : index
    %c0_12 = arith.constant 0 : index
    %c0_13 = arith.constant 0 : index
    %5 = vector.load %arg0[%c0_9, %c0_10, %c1, %c0_11, %c0_12, %c0_13] : memref<1x2x2x2x5x6xf32, #tpu.memory_space<vmem>>, vector<1x1x1x2x4x5xf32>
    %6 = vector.shape_cast %5 : vector<1x1x1x2x4x5xf32> to vector<2x4x5xf32>
    %7 = vector.shape_cast %6 : vector<2x4x5xf32> to vector<2x20xf32>
    %c0_14 = arith.constant 0 : index
    %c0_15 = arith.constant 0 : index
    %c0_16 = arith.constant 0 : index
    %c0_17 = arith.constant 0 : index
    %c0_18 = arith.constant 0 : index
    %c1_19 = arith.constant 1 : index
    %8 = vector.load %arg0[%c0_14, %c0_15, %c0_16, %c0_17, %c0_18, %c1_19] : memref<1x2x2x2x5x6xf32, #tpu.memory_space<vmem>>, vector<1x1x1x2x4x5xf32>
    %9 = vector.shape_cast %8 : vector<1x1x1x2x4x5xf32> to vector<2x4x5xf32>
    %10 = vector.shape_cast %9 : vector<2x4x5xf32> to vector<2x20xf32>
    %c0_20 = arith.constant 0 : index
    %c1_21 = arith.constant 1 : index
    %c0_22 = arith.constant 0 : index
    %c0_23 = arith.constant 0 : index
    %c0_24 = arith.constant 0 : index
    %c0_25 = arith.constant 0 : index
    %11 = vector.load %arg0[%c0_20, %c1_21, %c0_22, %c0_23, %c0_24, %c0_25] : memref<1x2x2x2x5x6xf32, #tpu.memory_space<vmem>>, vector<1x1x1x2x4x5xf32>
    %12 = vector.shape_cast %11 : vector<1x1x1x2x4x5xf32> to vector<2x4x5xf32>
    %13 = vector.shape_cast %12 : vector<2x4x5xf32> to vector<2x20xf32>
    %c0_26 = arith.constant 0 : index
    %c1_27 = arith.constant 1 : index
    %c1_28 = arith.constant 1 : index
    %c0_29 = arith.constant 0 : index
    %c0_30 = arith.constant 0 : index
    %c0_31 = arith.constant 0 : index
    %14 = vector.load %arg0[%c0_26, %c1_27, %c1_28, %c0_29, %c0_30, %c0_31] : memref<1x2x2x2x5x6xf32, #tpu.memory_space<vmem>>, vector<1x1x1x2x4x5xf32>
    %15 = vector.shape_cast %14 : vector<1x1x1x2x4x5xf32> to vector<2x4x5xf32>
    %16 = vector.shape_cast %15 : vector<2x4x5xf32> to vector<2x20xf32>
    %c0_32 = arith.constant 0 : index
    %c1_33 = arith.constant 1 : index
    %c0_34 = arith.constant 0 : index
    %c0_35 = arith.constant 0 : index
    %c0_36 = arith.constant 0 : index
    %c1_37 = arith.constant 1 : index
    %17 = vector.load %arg0[%c0_32, %c1_33, %c0_34, %c0_35, %c0_36, %c1_37] : memref<1x2x2x2x5x6xf32, #tpu.memory_space<vmem>>, vector<1x1x1x2x4x5xf32>
    %18 = vector.shape_cast %17 : vector<1x1x1x2x4x5xf32> to vector<2x4x5xf32>
    %19 = vector.shape_cast %18 : vector<2x4x5xf32> to vector<2x20xf32>
    %c0_38 = arith.constant 0 : index
    %c0_39 = arith.constant 0 : index
    %c0_40 = arith.constant 0 : index
    %c0_41 = arith.constant 0 : index
    %c1_42 = arith.constant 1 : index
    %c0_43 = arith.constant 0 : index
    %20 = vector.load %arg0[%c0_38, %c0_39, %c0_40, %c0_41, %c1_42, %c0_43] : memref<1x2x2x2x5x6xf32, #tpu.memory_space<vmem>>, vector<1x1x1x2x4x5xf32>
    %21 = vector.shape_cast %20 : vector<1x1x1x2x4x5xf32> to vector<2x4x5xf32>
    %22 = vector.shape_cast %21 : vector<2x4x5xf32> to vector<2x20xf32>
    %c0_44 = arith.constant 0 : index
    %c0_45 = arith.constant 0 : index
    %c1_46 = arith.constant 1 : index
    %c0_47 = arith.constant 0 : index
    %c1_48 = arith.constant 1 : index
    %c0_49 = arith.constant 0 : index
    %23 = vector.load %arg0[%c0_44, %c0_45, %c1_46, %c0_47, %c1_48, %c0_49] : memref<1x2x2x2x5x6xf32, #tpu.memory_space<vmem>>, vector<1x1x1x2x4x5xf32>
    %24 = vector.shape_cast %23 : vector<1x1x1x2x4x5xf32> to vector<2x4x5xf32>
    %25 = vector.shape_cast %24 : vector<2x4x5xf32> to vector<2x20xf32>
    %c0_50 = arith.constant 0 : index
    %c0_51 = arith.constant 0 : index
    %c0_52 = arith.constant 0 : index
    %c0_53 = arith.constant 0 : index
    %c1_54 = arith.constant 1 : index
    %c1_55 = arith.constant 1 : index
    %26 = vector.load %arg0[%c0_50, %c0_51, %c0_52, %c0_53, %c1_54, %c1_55] : memref<1x2x2x2x5x6xf32, #tpu.memory_space<vmem>>, vector<1x1x1x2x4x5xf32>
    %27 = vector.shape_cast %26 : vector<1x1x1x2x4x5xf32> to vector<2x4x5xf32>
    %28 = vector.shape_cast %27 : vector<2x4x5xf32> to vector<2x20xf32>
    %29 = tpu.concatenate %4, %7, %10, %13, %16, %19, %22, %25, %28 in 0 : vector<2x20xf32>, vector<2x20xf32>, vector<2x20xf32>, vector<2x20xf32>, vector<2x20xf32>, vector<2x20xf32>, vector<2x20xf32>, vector<2x20xf32>, vector<2x20xf32> -> vector<18x20xf32>
    %cst = arith.constant dense<0.000000e+00> : vector<3x20xf32>
    %30 = tpu.matmul %0, %29, %cst {dimension_numbers = #tpu.dot_dimension_numbers<[1], [0], [0], [1], [0, 0, 1, 1], [], []>} : vector<3x18xf32>, vector<18x20xf32>, vector<3x20xf32> -> vector<3x20xf32>
    %31 = vector.broadcast %1 : vector<3x1xf32> to vector<3x20xf32>
    %32 = arith.addf %30, %31 : vector<3x20xf32>
    %c0_56 = arith.constant 0 : index
    %c0_57 = arith.constant 0 : index
    %c0_58 = arith.constant 0 : index
    %33 = vector.load %arg3[%c0_56, %c0_57, %c0_58] : memref<1x3x20xf32, #tpu.memory_space<vmem>>, vector<1x3x20xf32>
    %34 = vector.shape_cast %33 : vector<1x3x20xf32> to vector<3x20xf32>
    %35 = vector.shape_cast %32 : vector<3x20xf32> to vector<1x3x20xf32>
    tpu.vector_store %arg3[%c0_56, %c0_57, %c0_58], %35 {strides = array<i32>} : memref<1x3x20xf32, #tpu.memory_space<vmem>>, vector<1x3x20xf32>,
    return
  }
}

</mosaic_0001>

<llo_original>
// kernel: tpu_custom_call.1
$region0: #{tpu_custom_call.1}
  #allocation0 [shape = 'u32[]', space=smem, size = 0x4, offset = 0x4, fixed_abs, tag = 'smem constant byte address 0x4 - core index']
  #allocation1 [shape = 'u32[144,128]{1,0:T(1,128)}', space=vmem, size = 0x12000, scoped, tag = 'internal scratch']
  %s0 = inlined_call_operand.vmem [shape: f32[1,2,2,2,5,6], index: 0, kind: input, shape index: {}]
  %s1 = inlined_call_operand.vmem [shape: f32[3,18], index: 1, kind: input, shape index: {}]
  %s2 = inlined_call_operand.vmem [shape: f32[3,1], index: 2, kind: input, shape index: {}]
  %s3 = inlined_call_operand.vmem [shape: f32[1,3,20], index: 3, kind: output, shape index: {}]
  %s4 = sld [smem:[#allocation0]]
  $region22: #{tpu_custom_call.1} parent=0
    _
  %s6 = ssub.s32 1, %s4
  %s7 = scalar_select 0, %s6, %s4
  // Predicated region
  $region2: #{tpu_custom_call.1} parent=0 // pred_check
    _
  $region3: #{tpu_custom_call.1} parent=0 // pred_check_branch
    %9 = sbr.rel (0) target = $region5
  $region4: #{tpu_custom_call.1} parent=0 // pred_region
    _
  $region5: #{tpu_custom_call.1} parent=0 // pred_fallthru
    _
  // Predicated region
  $region6: #{tpu_custom_call.1} parent=0 // pred_check
    _
  $region7: #{tpu_custom_call.1} parent=0 // pred_check_branch
    %11 = sbr.rel (0) target = $region9
  $region8: #{tpu_custom_call.1} parent=0 // pred_region
    _
  $region9: #{tpu_custom_call.1} parent=0 // pred_fallthru
    _
  // Predicated region
  $region10: #{tpu_custom_call.1} parent=0 // pred_check
    _
  $region11: #{tpu_custom_call.1} parent=0 // pred_check_branch
    %13 = sbr.rel (0) target = $region13
  $region12: #{tpu_custom_call.1} parent=0 // pred_region
    _
  $region13: #{tpu_custom_call.1} parent=0 // pred_fallthru
    _
  %v14 = vld [vmem:[%s1] sm:$0x7]
  %v15 = vld [vmem:[%s2] sm:$0x7]
  %v16 = vld [vmem:[%s0] sm:$0xf]
  %v18 = vunpack.c.l.s4 1983009808
  %v19 = vunpack.c.0.s8 %v18
  %v20 = vlaneseq
  %v21 = vshrl.u32 %v20, 7
  %v22 = vsub.s32 %v19, %v21
  %v23 = vrot.slane %v16, %v22
  %v24 = vld [vmem:[%s0 + $0x8] sm:$0xf]
  %v26 = vunpack.c.l.s4 1983009808
  %v27 = vunpack.c.0.s8 %v26
  %v28 = vlaneseq
  %v29 = vshrl.u32 %v28, 7
  %v30 = vsub.s32 %v27, %v29
  %v31 = vrot.slane %v24, %v30
  %v32 = vcombine.low %v23, %v31
  %v33 = vcombine.high %v23, %v31
  %v35 = vunpack.c.l.s4 1934713408
  %v36 = vunpack.c.0.s8 %v35
  %v37 = vlaneseq
  %v38 = vshrl.u32 %v37, 7
  %v39 = vsub.s32 %v36, %v38
  %v40 = vrot.slane %v32, %v39
  %v42 = vunpack.c.l.s4 1934713408
  %v43 = vunpack.c.0.s8 %v42
  %v44 = vlaneseq
  %v45 = vshrl.u32 %v44, 7
  %v46 = vsub.s32 %v43, %v45
  %v47 = vrot.slane %v33, %v46
  %v48 = vcombine.high %v40, 0.0
  %v49 = vcombine.high %v47, 0.0
  %51 = vrot.lane.b32.xlu0 %v48, 5
  %v52 = vpop.permute.xlu0 %51
  %55 = vrot.lane.b32.xlu0 %v47, 10
  %v56 = vpop.permute.xlu0 %55
  %59 = vrot.lane.b32.xlu0 %v49, 15
  %v60 = vpop.permute.xlu0 %59
  %vm62 = vcmask 39936
  %v63 = vsel %vm62, %v40, %v52
  %vm64 = vcmask 80896
  %v65 = vsel %vm64, %v63, %v56
  %vm66 = vcmask 121856
  %v67 = vsel %vm66, %v65, %v60
  %s68 = scalar_lea.vmem %s0, 16
  %v69 = vld [vmem:[%s68] sm:$0xf]
  %v71 = vunpack.c.l.s4 1983009808
  %v72 = vunpack.c.0.s8 %v71
  %v73 = vlaneseq
  %v74 = vshrl.u32 %v73, 7
  %v75 = vsub.s32 %v72, %v74
  %v76 = vrot.slane %v69, %v75
  %v77 = vld [vmem:[%s68 + $0x8] sm:$0xf]
  %v79 = vunpack.c.l.s4 1983009808
  %v80 = vunpack.c.0.s8 %v79
  %v81 = vlaneseq
  %v82 = vshrl.u32 %v81, 7
  %v83 = vsub.s32 %v80, %v82
  %v84 = vrot.slane %v77, %v83
  %v85 = vcombine.low %v76, %v84
  %v86 = vcombine.high %v76, %v84
  %v88 = vunpack.c.l.s4 1934713408
  %v89 = vunpack.c.0.s8 %v88
  %v90 = vlaneseq
  %v91 = vshrl.u32 %v90, 7
  %v92 = vsub.s32 %v89, %v91
  %v93 = vrot.slane %v85, %v92
  %v95 = vunpack.c.l.s4 1934713408
  %v96 = vunpack.c.0.s8 %v95
  %v97 = vlaneseq
  %v98 = vshrl.u32 %v97, 7
  %v99 = vsub.s32 %v96, %v98
  %v100 = vrot.slane %v86, %v99
  %v101 = vcombine.high %v93, 0.0
  %v102 = vcombine.high %v100, 0.0
  %104 = vrot.lane.b32.xlu0 %v101, 5
  %v105 = vpop.permute.xlu0 %104
  %108 = vrot.lane.b32.xlu0 %v100, 10
  %v109 = vpop.permute.xlu0 %108
  %112 = vrot.lane.b32.xlu0 %v102, 15
  %v113 = vpop.permute.xlu0 %112
  %v115 = vsel %vm62, %v93, %v105
  %v116 = vsel %vm64, %v115, %v109
  %v117 = vsel %vm66, %v116, %v113
  %120 = vrot.lane.b32.xlu0 %v16, 127
  %v121 = vpop.permute.xlu0 %120
  %122 = vrot.lane.b32.xlu0 %v24, 127
  %v123 = vpop.permute.xlu0 %122
  %v126 = vunpack.c.l.s4 1983009808
  %v127 = vunpack.c.0.s8 %v126
  %v128 = vlaneseq
  %v129 = vshrl.u32 %v128, 7
  %v130 = vsub.s32 %v127, %v129
  %v131 = vrot.slane %v121, %v130
  %v134 = vunpack.c.l.s4 1983009808
  %v135 = vunpack.c.0.s8 %v134
  %v136 = vlaneseq
  %v137 = vshrl.u32 %v136, 7
  %v138 = vsub.s32 %v135, %v137
  %v139 = vrot.slane %v123, %v138
  %v140 = vcombine.low %v131, %v139
  %v141 = vcombine.high %v131, %v139
  %v143 = vunpack.c.l.s4 1934713408
  %v144 = vunpack.c.0.s8 %v143
  %v145 = vlaneseq
  %v146 = vshrl.u32 %v145, 7
  %v147 = vsub.s32 %v144, %v146
  %v148 = vrot.slane %v140, %v147
  %v150 = vunpack.c.l.s4 1934713408
  %v151 = vunpack.c.0.s8 %v150
  %v152 = vlaneseq
  %v153 = vshrl.u32 %v152, 7
  %v154 = vsub.s32 %v151, %v153
  %v155 = vrot.slane %v141, %v154
  %v156 = vcombine.high %v148, 0.0
  %v157 = vcombine.high %v155, 0.0
  %159 = vrot.lane.b32.xlu0 %v156, 5
  %v160 = vpop.permute.xlu0 %159
  %163 = vrot.lane.b32.xlu0 %v155, 10
  %v164 = vpop.permute.xlu0 %163
  %167 = vrot.lane.b32.xlu0 %v157, 15
  %v168 = vpop.permute.xlu0 %167
  %v170 = vsel %vm62, %v148, %v160
  %v171 = vsel %vm64, %v170, %v164
  %v172 = vsel %vm66, %v171, %v168
  %s173 = scalar_lea.vmem %s0, 32
  %v174 = vld [vmem:[%s173] sm:$0xf]
  %v176 = vunpack.c.l.s4 1983009808
  %v177 = vunpack.c.0.s8 %v176
  %v178 = vlaneseq
  %v179 = vshrl.u32 %v178, 7
  %v180 = vsub.s32 %v177, %v179
  %v181 = vrot.slane %v174, %v180
  %v182 = vld [vmem:[%s173 + $0x8] sm:$0xf]
  %v184 = vunpack.c.l.s4 1983009808
  %v185 = vunpack.c.0.s8 %v184
  %v186 = vlaneseq
  %v187 = vshrl.u32 %v186, 7
  %v188 = vsub.s32 %v185, %v187
  %v189 = vrot.slane %v182, %v188
  %v190 = vcombine.low %v181, %v189
  %v191 = vcombine.high %v181, %v189
  %v193 = vunpack.c.l.s4 1934713408
  %v194 = vunpack.c.0.s8 %v193
  %v195 = vlaneseq
  %v196 = vshrl.u32 %v195, 7
  %v197 = vsub.s32 %v194, %v196
  %v198 = vrot.slane %v190, %v197
  %v200 = vunpack.c.l.s4 1934713408
  %v201 = vunpack.c.0.s8 %v200
  %v202 = vlaneseq
  %v203 = vshrl.u32 %v202, 7
  %v204 = vsub.s32 %v201, %v203
  %v205 = vrot.slane %v191, %v204
  %v206 = vcombine.high %v198, 0.0
  %v207 = vcombine.high %v205, 0.0
  %209 = vrot.lane.b32.xlu0 %v206, 5
  %v210 = vpop.permute.xlu0 %209
  %213 = vrot.lane.b32.xlu0 %v205, 10
  %v214 = vpop.permute.xlu0 %213
  %217 = vrot.lane.b32.xlu0 %v207, 15
  %v218 = vpop.permute.xlu0 %217
  %v220 = vsel %vm62, %v198, %v210
  %v221 = vsel %vm64, %v220, %v214
  %v222 = vsel %vm66, %v221, %v218
  %s223 = scalar_lea.vmem %s0, 48
  %v224 = vld [vmem:[%s223] sm:$0xf]
  %v226 = vunpack.c.l.s4 1983009808
  %v227 = vunpack.c.0.s8 %v226
  %v228 = vlaneseq
  %v229 = vshrl.u32 %v228, 7
  %v230 = vsub.s32 %v227, %v229
  %v231 = vrot.slane %v224, %v230
  %v232 = vld [vmem:[%s223 + $0x8] sm:$0xf]
  %v234 = vunpack.c.l.s4 1983009808
  %v235 = vunpack.c.0.s8 %v234
  %v236 = vlaneseq
  %v237 = vshrl.u32 %v236, 7
  %v238 = vsub.s32 %v235, %v237
  %v239 = vrot.slane %v232, %v238
  %v240 = vcombine.low %v231, %v239
  %v241 = vcombine.high %v231, %v239
  %v243 = vunpack.c.l.s4 1934713408
  %v244 = vunpack.c.0.s8 %v243
  %v245 = vlaneseq
  %v246 = vshrl.u32 %v245, 7
  %v247 = vsub.s32 %v244, %v246
  %v248 = vrot.slane %v240, %v247
  %v250 = vunpack.c.l.s4 1934713408
  %v251 = vunpack.c.0.s8 %v250
  %v252 = vlaneseq
  %v253 = vshrl.u32 %v252, 7
  %v254 = vsub.s32 %v251, %v253
  %v255 = vrot.slane %v241, %v254
  %v256 = vcombine.high %v248, 0.0
  %v257 = vcombine.high %v255, 0.0
  %259 = vrot.lane.b32.xlu0 %v256, 5
  %v260 = vpop.permute.xlu0 %259
  %263 = vrot.lane.b32.xlu0 %v255, 10
  %v264 = vpop.permute.xlu0 %263
  %267 = vrot.lane.b32.xlu0 %v257, 15
  %v268 = vpop.permute.xlu0 %267
  %v270 = vsel %vm62, %v248, %v260
  %v271 = vsel %vm64, %v270, %v264
  %v272 = vsel %vm66, %v271, %v268
  %275 = vrot.lane.b32.xlu0 %v174, 127
  %v276 = vpop.permute.xlu0 %275
  %277 = vrot.lane.b32.xlu0 %v182, 127
  %v278 = vpop.permute.xlu0 %277
  %v281 = vunpack.c.l.s4 1983009808
  %v282 = vunpack.c.0.s8 %v281
  %v283 = vlaneseq
  %v284 = vshrl.u32 %v283, 7
  %v285 = vsub.s32 %v282, %v284
  %v286 = vrot.slane %v276, %v285
  %v289 = vunpack.c.l.s4 1983009808
  %v290 = vunpack.c.0.s8 %v289
  %v291 = vlaneseq
  %v292 = vshrl.u32 %v291, 7
  %v293 = vsub.s32 %v290, %v292
  %v294 = vrot.slane %v278, %v293
  %v295 = vcombine.low %v286, %v294
  %v296 = vcombine.high %v286, %v294
  %v298 = vunpack.c.l.s4 1934713408
  %v299 = vunpack.c.0.s8 %v298
  %v300 = vlaneseq
  %v301 = vshrl.u32 %v300, 7
  %v302 = vsub.s32 %v299, %v301
  %v303 = vrot.slane %v295, %v302
  %v305 = vunpack.c.l.s4 1934713408
  %v306 = vunpack.c.0.s8 %v305
  %v307 = vlaneseq
  %v308 = vshrl.u32 %v307, 7
  %v309 = vsub.s32 %v306, %v308
  %v310 = vrot.slane %v296, %v309
  %v311 = vcombine.high %v303, 0.0
  %v312 = vcombine.high %v310, 0.0
  %314 = vrot.lane.b32.xlu0 %v311, 5
  %v315 = vpop.permute.xlu0 %314
  %318 = vrot.lane.b32.xlu0 %v310, 10
  %v319 = vpop.permute.xlu0 %318
  %322 = vrot.lane.b32.xlu0 %v312, 15
  %v323 = vpop.permute.xlu0 %322
  %v325 = vsel %vm62, %v303, %v315
  %v326 = vsel %vm64, %v325, %v319
  %v327 = vsel %vm66, %v326, %v323
  %v328 = vld [vmem:[%s0 + $0x1] sm:$0xf]
  %v330 = vunpack.c.l.s4 1983009808
  %v331 = vunpack.c.0.s8 %v330
  %v332 = vlaneseq
  %v333 = vshrl.u32 %v332, 7
  %v334 = vsub.s32 %v331, %v333
  %v335 = vrot.slane %v328, %v334
  %v336 = vld [vmem:[%s0 + $0x9] sm:$0xf]
  %v338 = vunpack.c.l.s4 1983009808
  %v339 = vunpack.c.0.s8 %v338
  %v340 = vlaneseq
  %v341 = vshrl.u32 %v340, 7
  %v342 = vsub.s32 %v339, %v341
  %v343 = vrot.slane %v336, %v342
  %v344 = vcombine.low %v335, %v343
  %v345 = vcombine.high %v335, %v343
  %v347 = vunpack.c.l.s4 1934713408
  %v348 = vunpack.c.0.s8 %v347
  %v349 = vlaneseq
  %v350 = vshrl.u32 %v349, 7
  %v351 = vsub.s32 %v348, %v350
  %v352 = vrot.slane %v344, %v351
  %v354 = vunpack.c.l.s4 1934713408
  %v355 = vunpack.c.0.s8 %v354
  %v356 = vlaneseq
  %v357 = vshrl.u32 %v356, 7
  %v358 = vsub.s32 %v355, %v357
  %v359 = vrot.slane %v345, %v358
  %v360 = vcombine.high %v352, 0.0
  %v361 = vcombine.high %v359, 0.0
  %363 = vrot.lane.b32.xlu0 %v360, 5
  %v364 = vpop.permute.xlu0 %363
  %367 = vrot.lane.b32.xlu0 %v359, 10
  %v368 = vpop.permute.xlu0 %367
  %371 = vrot.lane.b32.xlu0 %v361, 15
  %v372 = vpop.permute.xlu0 %371
  %v374 = vsel %vm62, %v352, %v364
  %v375 = vsel %vm64, %v374, %v368
  %v376 = vsel %vm66, %v375, %v372
  %v377 = vld [vmem:[%s68 + $0x1] sm:$0xf]
  %v379 = vunpack.c.l.s4 1983009808
  %v380 = vunpack.c.0.s8 %v379
  %v381 = vlaneseq
  %v382 = vshrl.u32 %v381, 7
  %v383 = vsub.s32 %v380, %v382
  %v384 = vrot.slane %v377, %v383
  %v385 = vld [vmem:[%s68 + $0x9] sm:$0xf]
  %v387 = vunpack.c.l.s4 1983009808
  %v388 = vunpack.c.0.s8 %v387
  %v389 = vlaneseq
  %v390 = vshrl.u32 %v389, 7
  %v391 = vsub.s32 %v388, %v390
  %v392 = vrot.slane %v385, %v391
  %v393 = vcombine.low %v384, %v392
  %v394 = vcombine.high %v384, %v392
  %v396 = vunpack.c.l.s4 1934713408
  %v397 = vunpack.c.0.s8 %v396
  %v398 = vlaneseq
  %v399 = vshrl.u32 %v398, 7
  %v400 = vsub.s32 %v397, %v399
  %v401 = vrot.slane %v393, %v400
  %v403 = vunpack.c.l.s4 1934713408
  %v404 = vunpack.c.0.s8 %v403
  %v405 = vlaneseq
  %v406 = vshrl.u32 %v405, 7
  %v407 = vsub.s32 %v404, %v406
  %v408 = vrot.slane %v394, %v407
  %v409 = vcombine.high %v401, 0.0
  %v410 = vcombine.high %v408, 0.0
  %412 = vrot.lane.b32.xlu0 %v409, 5
  %v413 = vpop.permute.xlu0 %412
  %416 = vrot.lane.b32.xlu0 %v408, 10
  %v417 = vpop.permute.xlu0 %416
  %420 = vrot.lane.b32.xlu0 %v410, 15
  %v421 = vpop.permute.xlu0 %420
  %v423 = vsel %vm62, %v401, %v413
  %v424 = vsel %vm64, %v423, %v417
  %v425 = vsel %vm66, %v424, %v421
  %428 = vrot.lane.b32.xlu0 %v328, 127
  %v429 = vpop.permute.xlu0 %428
  %430 = vrot.lane.b32.xlu0 %v336, 127
  %v431 = vpop.permute.xlu0 %430
  %v434 = vunpack.c.l.s4 1983009808
  %v435 = vunpack.c.0.s8 %v434
  %v436 = vlaneseq
  %v437 = vshrl.u32 %v436, 7
  %v438 = vsub.s32 %v435, %v437
  %v439 = vrot.slane %v429, %v438
  %v442 = vunpack.c.l.s4 1983009808
  %v443 = vunpack.c.0.s8 %v442
  %v444 = vlaneseq
  %v445 = vshrl.u32 %v444, 7
  %v446 = vsub.s32 %v443, %v445
  %v447 = vrot.slane %v431, %v446
  %v448 = vcombine.low %v439, %v447
  %v449 = vcombine.high %v439, %v447
  %v451 = vunpack.c.l.s4 1934713408
  %v452 = vunpack.c.0.s8 %v451
  %v453 = vlaneseq
  %v454 = vshrl.u32 %v453, 7
  %v455 = vsub.s32 %v452, %v454
  %v456 = vrot.slane %v448, %v455
  %v458 = vunpack.c.l.s4 1934713408
  %v459 = vunpack.c.0.s8 %v458
  %v460 = vlaneseq
  %v461 = vshrl.u32 %v460, 7
  %v462 = vsub.s32 %v459, %v461
  %v463 = vrot.slane %v449, %v462
  %v464 = vcombine.high %v456, 0.0
  %v465 = vcombine.high %v463, 0.0
  %467 = vrot.lane.b32.xlu0 %v464, 5
  %v468 = vpop.permute.xlu0 %467
  %471 = vrot.lane.b32.xlu0 %v463, 10
  %v472 = vpop.permute.xlu0 %471
  %475 = vrot.lane.b32.xlu0 %v465, 15
  %v476 = vpop.permute.xlu0 %475
  %v478 = vsel %vm62, %v456, %v468
  %v479 = vsel %vm64, %v478, %v472
  %v480 = vsel %vm66, %v479, %v476
  %v482 = vrot.slane %v117, 6
  %v485 = vrot.slane %v172, 4
  %v488 = vrot.slane %v222, 2
  %v491 = vrot.slane %v327, 6
  %v494 = vrot.slane %v376, 4
  %v497 = vrot.slane %v425, 2
  %vm499 = vcmask 1041408
  %v500 = vsel %vm499, %v67, %v482
  %vm501 = vcmask 1043456
  %v502 = vsel %vm501, %v500, %v485
  %vm503 = vcmask 1045504
  %v504 = vsel %vm503, %v502, %v488
  %v505 = vsel %vm499, %v272, %v491
  %v506 = vsel %vm501, %v505, %v494
  %v507 = vsel %vm503, %v506, %v497
  %509 = vset.pattern.permute.xlu0 0
  %510 = vperm.xlu0 %509, %v15
  %v511 = vpop.permute.xlu0 %510
  %vm513 = vcmask 146432
  %v515 = vsel %vm513, %v14, 0
  %v518 = vsel %vm499, %v480, 0
  %520 = vmatprep.subr.mxu0 0.0
  %521 = vmatpush1.msra.mxu0 %v504
  %522 = vmatprep.subr.mxu0 0.0
  %523 = vmatpush1.msra.mxu0 %v507
  %524 = vmatprep.subr.mxu0 0.0
  %525 = vmatpush1.msra.mxu0 %v518
  %526 = vmatprep.subr.mxu0 0.0
  %527 = vmatpush1.msra.mxu0 0.0
  %528 = vmatprep.subr.mxu0 0.0
  %529 = vmatpush1.msra.mxu0 0.0
  %530 = vmatprep.subr.mxu0 0.0
  %531 = vmatpush1.msra.mxu0 0.0
  %532 = vmatprep.subr.mxu0 0.0
  %533 = vmatpush1.msra.mxu0 0.0
  %534 = vmatprep.subr.mxu0 0.0
  %535 = vmatpush1.msra.mxu0 0.0
  %536 = vmatprep.subr.mxu0 0.0
  %537 = vmatpush1.msra.mxu0 0.0
  %538 = vmatprep.subr.mxu0 0.0
  %539 = vmatpush1.msra.mxu0 0.0
  %540 = vmatprep.subr.mxu0 0.0
  %541 = vmatpush1.msra.mxu0 0.0
  %542 = vmatprep.subr.mxu0 0.0
  %543 = vmatpush1.msra.mxu0 0.0
  %544 = vmatprep.subr.mxu0 0.0
  %545 = vmatpush1.msra.mxu0 0.0
  %546 = vmatprep.subr.mxu0 0.0
  %547 = vmatpush1.msra.mxu0 0.0
  %548 = vmatprep.subr.mxu0 0.0
  %549 = vmatpush1.msra.mxu0 0.0
  %550 = vmatprep.subr.mxu0 0.0
  %551 = vmatpush1.msra.mxu0 0.0
  %552 = vmatprep.subr.mxu0 0.0
  %553 = vmatpush1.msra.mxu0 0.0
  %554 = vmatprep.subr.mxu0 0.0
  %555 = vmatpush1.msra.mxu0 0.0
  %556 = vmatprep.subr.mxu0 0.0
  %557 = vmatpush1.msra.mxu0 0.0
  %558 = vmatprep.subr.mxu0 0.0
  %559 = vmatpush1.msra.mxu0 0.0
  %560 = vmatprep.subr.mxu0 0.0
  %561 = vmatpush1.msra.mxu0 0.0
  %562 = vmatprep.subr.mxu0 0.0
  %563 = vmatpush1.msra.mxu0 0.0
  %564 = vmatprep.subr.mxu0 0.0
  %565 = vmatpush1.msra.mxu0 0.0
  %566 = vmatprep.subr.mxu0 0.0
  %567 = vmatpush1.msra.mxu0 0.0
  %568 = vmatprep.subr.mxu0 0.0
  %569 = vmatpush1.msra.mxu0 0.0
  %570 = vmatprep.subr.mxu0 0.0
  %571 = vmatpush1.msra.mxu0 0.0
  %572 = vmatprep.subr.mxu0 0.0
  %573 = vmatpush1.msra.mxu0 0.0
  %574 = vmatprep.subr.mxu0 0.0
  %575 = vmatpush1.msra.mxu0 0.0
  %576 = vmatprep.subr.mxu0 0.0
  %577 = vmatpush1.msra.mxu0 0.0
  %578 = vmatprep.subr.mxu0 0.0
  %579 = vmatpush1.msra.mxu0 0.0
  %580 = vmatprep.subr.mxu0 0.0
  %581 = vmatpush1.msra.mxu0 0.0
  %582 = vmatprep.subr.mxu0 0.0
  %583 = vmatpush1.msra.mxu0 0.0
  %584 = vmatprep.mubr.f32.mxu0 0.0
  %585 = vmatmul.mubr.f32.gmra.mrb[0].mxu0 %v515
  %v586 = vpop.f32.mrb[0].mxu0
  %v587 = vadd.f32 %v511, %v586
  %v588 = vpop.f32.mrb[0].mxu0
  %589 = vdwg.mxu0
  %vm590 = vcmask 157696
  %591 = vst.msk [vmem:[%s3] sm:$0x7] %vm590, %v587
  // Predicated region
  $region14: #{tpu_custom_call.1} parent=0 // pred_check
    _
  $region15: #{tpu_custom_call.1} parent=0 // pred_check_branch
    %593 = sbr.rel (0) target = $region17
  $region16: #{tpu_custom_call.1} parent=0 // pred_region
    _
  $region17: #{tpu_custom_call.1} parent=0 // pred_fallthru
    _
  // Predicated region
  $region18: #{tpu_custom_call.1} parent=0 // pred_check
    _
  $region19: #{tpu_custom_call.1} parent=0 // pred_check_branch
    %595 = sbr.rel (0) target = $region21
  $region20: #{tpu_custom_call.1} parent=0 // pred_region
    _
  $region21: #{tpu_custom_call.1} parent=0 // pred_fallthru
    _

</llo_original>
